<compile_context>
chip_gen: v5e
topology: v5e:2x2
jax: 0.10.0
libtpu: 0.0.40
codegen_flags: <defaults>
</compile_context>

<pallas_src>
import functools

import jax
import jax.numpy as jnp
import numpy as np
from jax.experimental import pallas as pl
from jax.experimental.pallas import tpu as pltpu

_ROW = 16  # row-tile granularity: multiple of 16 keeps bf16 (16,128) packing legal


def _round_up(a, m):
    return (a + m - 1) // m * m


def _softplus(x):
    # numerically-stable softplus, matches F.softplus(beta=1)
    return jnp.maximum(x, 0.0) + jnp.log1p(jnp.exp(-jnp.abs(x)))


def actor_kernel(x_ref, wx_ref, b_ref, mh_ref, out_ref, *, eh_pad):
    """One batch tile: x [Gt, nn*ns] -> packed softplus'd heads [Gt, OUT]."""
    x = x_ref[...]                                                    # [Gt, nn*ns]
    # matmul 1 (MXU, f32 accum): EdgeConv gather + mlp[0]  AND  head @ x
    t = (jnp.dot(x, wx_ref[...], preferred_element_type=jnp.float32)
         + b_ref[...])                                                # [Gt, EH_pad+OUT] f32
    h = jnp.maximum(t[:, :eh_pad], 0.0).astype(mh_ref.dtype)         # ReLU msgs (bf16)
    # matmul 2 (MXU): mlp[2] + scatter-add at src + head @ agg, folded into MH
    logits = t[:, eh_pad:] + jnp.dot(h, mh_ref[...],
                                     preferred_element_type=jnp.float32)
    out_ref[...] = _softplus(logits).astype(out_ref.dtype)           # [Gt, OUT]


def _pack_params(params, src_l, dst_l, ns, H, nnodes, dtype):
    """Fold EdgeConv + heads into two packed matrices + one bias row."""
    Eg = int(src_l.shape[0])
    EH = Eg * H
    eh_pad = _round_up(EH, 128)              # keep the in-kernel slice lane-aligned
    out_cols = _round_up(3 * nnodes, 128)    # lane-dense (unmasked) output stores

    f32 = np.float32
    w1 = np.asarray(params["w1"], f32)       # [2*ns, H]   EdgeConv mlp[0]
    b1 = np.asarray(params["b1"], f32)       # [H]
    w2 = np.asarray(params["w2"], f32)       # [H, H]      EdgeConv mlp[2]
    b2 = np.asarray(params["b2"], f32)       # [H]
    wc, bc = np.asarray(params["wc"], f32), np.asarray(params["bc"], f32)
    wmu, bmu = np.asarray(params["wmu"], f32), np.asarray(params["bmu"], f32)
    wsig, bsig = np.asarray(params["wsig"], f32), np.asarray(params["bsig"], f32)

    w1a, w1b = w1[:ns], w1[ns:]              # x_i / x_j halves of the concat
    s_src = np.zeros((Eg, nnodes), f32)
    s_src[np.arange(Eg), src_l] = 1.0
    s_dst = np.zeros((Eg, nnodes), f32)
    s_dst[np.arange(Eg), dst_l] = 1.0

    # gather + mlp[0]:  x_flat [nn*ns] -> pre-ReLU messages [Eg*H]
    m1 = (np.einsum("en,fk->nfek", s_src, w1a)
          + np.einsum("en,fk->nfek", s_dst, w1b)).reshape(nnodes * ns, EH)
    b1_tiled = np.tile(b1, Eg)                                        # [EH]

    # mlp[2] + aggr='add' at src (flow='target_to_source'): msgs -> agg [nn*H]
    m2 = np.einsum("en,kh->eknh", s_src, w2).reshape(EH, nnodes * H)
    deg = s_src.sum(axis=0)                                           # [nn]
    agg_bias = (deg[:, None] * b2[None, :]).reshape(nnodes * H)

    # heads (concentration | mu | sigma), block-diag over nodes; grouped cols:
    #   col = c*nnodes + n,  c in {0:conc, 1:alpha, 2:beta}
    wx_head = np.concatenate([wc[:ns], wmu[:ns], wsig[:ns]], axis=1)  # [ns, 3]
    wh_head = np.concatenate([wc[ns:], wmu[ns:], wsig[ns:]], axis=1)  # [H, 3]
    b_head = np.concatenate([bc, bmu, bsig])                          # [3]
    eye_n = np.eye(nnodes, dtype=f32)
    hx = np.einsum("fc,nm->nfcm", wx_head, eye_n).reshape(nnodes * ns, 3 * nnodes)
    ha = np.einsum("hc,nm->nhcm", wh_head, eye_n).reshape(nnodes * H, 3 * nnodes)

    # fold layer-2+scatter with the head-agg projection:  ReLU(h) @ (m2 @ ha)
    mh = m2 @ ha                                                      # [EH, 3*nn]
    # pre-softplus epsilons from the PyTorch forward (+1e-10 conc, +1e-20 mu/sig)
    eps = np.concatenate([np.full(nnodes, 1e-10, f32),
                          np.full(2 * nnodes, 1e-20, f32)])
    head_bias = np.repeat(b_head, nnodes) + agg_bias @ ha + eps       # [3*nn]

    wcols = eh_pad + out_cols
    wx = np.zeros((nnodes * ns, wcols), f32)
    wx[:, :EH] = m1
    wx[:, eh_pad:eh_pad + 3 * nnodes] = hx
    bvec = np.zeros((wcols,), f32)
    bvec[:EH] = b1_tiled
    bvec[eh_pad:eh_pad + 3 * nnodes] = head_bias
    mh_full = np.zeros((eh_pad, out_cols), f32)
    mh_full[:EH, :3 * nnodes] = mh

    # folding is done in f32; only the final packed matrices are cast to `dtype`
    return (jnp.asarray(wx, dtype), jnp.asarray(bvec, jnp.float32),
            jnp.asarray(mh_full, dtype), eh_pad, out_cols)


def _pallas_forward(xg, wx, bvec2d, mh, *, gt, eh_pad, in_cols, wcols, out_cols,
                    out_dtype, vmem_limit, single_buffer_weights):
    b_pad = xg.shape[0]

    def wspec(shape):
        if single_buffer_weights:
            # constant-index resident weights: one VMEM buffer is enough
            return pl.BlockSpec(shape, lambda i: (0, 0),
                                pipeline_mode=pl.Buffered(1))
        return pl.BlockSpec(shape, lambda i: (0, 0))

    return pl.pallas_call(
        functools.partial(actor_kernel, eh_pad=eh_pad),
        out_shape=jax.ShapeDtypeStruct((b_pad, out_cols), out_dtype),
        grid=(b_pad // gt,),
        in_specs=[
            pl.BlockSpec((gt, in_cols), lambda i: (i, 0)),    # x tile (pipelined)
            wspec((in_cols, wcols)),                          # packed Wx (resident)
            wspec((1, wcols)),                                # packed bias row (f32)
            wspec((eh_pad, out_cols)),                        # packed MH (resident)
        ],
        out_specs=pl.BlockSpec((gt, out_cols), lambda i: (i, 0)),
        compiler_params=pltpu.CompilerParams(
            dimension_semantics=("parallel",),
            vmem_limit_bytes=vmem_limit),
    )(xg, wx, bvec2d, mh)


def actor_forward(x, edge_index, params, high, *, nnodes, num_factories,
                  edge_attr=None, tile_graphs=None, compute_dtype=jnp.bfloat16):
    """Deterministic Actor.forward. edge_attr unused (edge_size=0)."""
    N, ns = x.shape
    B = N // nnodes
    H = int(np.asarray(params["w2"]).shape[1])

    # Per-graph (local) edge pattern: every graph in the PyG batch is assumed to
    # share graph 0's topology (both endpoints < nnodes), nodes batched contiguously.
    ei = np.asarray(edge_index)
    g0 = (ei[0] < nnodes) & (ei[1] < nnodes)
    src_l = ei[0][g0].astype(np.int32)       # x_i / aggregation index
    dst_l = ei[1][g0].astype(np.int32)       # x_j

    # TODO(synk): cache the packed weights across calls (depend only on params/topology)
    wx, bvec, mh, eh_pad, out_cols = _pack_params(params, src_l, dst_l, ns, H,
                                                  nnodes, compute_dtype)
    in_cols = nnodes * ns
    wcols = eh_pad + out_cols
    itemsize = np.dtype(compute_dtype).itemsize

    # --- batch-tile sizing, lane-padding aware VMEM budget --------------------
    # In VMEM the (gt, in_cols) x block is lane-padded to 128 cols, so a row
    # costs 128*itemsize; the (gt, out_cols) out block costs out_cols*itemsize.
    # Both are double-buffered by the pipeline.
    bytes_per_row = 2 * (128 * itemsize) + 2 * (out_cols * itemsize)
    tile_budget = 8 << 20                    # ~8 MiB of pipelined tiles: safe v5e..v7x
    gt_cap = max(_ROW, (tile_budget // bytes_per_row) // _ROW * _ROW)
    if tile_graphs is not None:
        gt_cap = min(gt_cap, max(_ROW, _round_up(int(tile_graphs), _ROW)))
    # keep >= 2 grid steps whenever B allows it so v7x's 2 TensorCores both get
    # work on the "parallel" batch axis (no-op on single-TC v5e/v6e).
    gt = min(gt_cap, _round_up((B + 1) // 2, _ROW))
    b_pad = _round_up(B, gt)

    xg = jnp.asarray(x, jnp.float32).reshape(B, in_cols)
    if b_pad != B:
        xg = jnp.pad(xg, ((0, b_pad - B), (0, 0)))
    xg = xg.astype(compute_dtype)

    # explicit scoped-VMEM request (tiles + weights + margin), clamped well under
    # v7x's 64 MiB physical VMEM; needed on v5e (16 MiB default) for large tiles.
    w_bytes = (wx.size + mh.size) * itemsize + 8 * wcols * 4
    vmem_limit = int(min(max(gt * bytes_per_row + 2 * w_bytes + (4 << 20),
                             16 << 20), 48 << 20))

    kwargs = dict(gt=gt, eh_pad=eh_pad, in_cols=in_cols, wcols=wcols,
                  out_cols=out_cols, out_dtype=compute_dtype,
                  vmem_limit=vmem_limit)
    try:
        out = _pallas_forward(xg, wx, bvec[None, :], mh,
                              single_buffer_weights=True, **kwargs)
    except Exception:
        # pl.Buffered(1) (single-buffered resident weights) unsupported on this
        # jax version -> fall back to plain (double-buffered) weight specs.
        out = _pallas_forward(xg, wx, bvec[None, :], mh,
                              single_buffer_weights=False, **kwargs)

    heads = out[:B, :3 * nnodes].astype(jnp.float32)
    conc = heads[:, :nnodes]                                             # [B, nn]
    alpha = heads[:, nnodes:2 * nnodes][:, nnodes - num_factories:] + 1e-20
    beta = heads[:, 2 * nnodes:][:, nnodes - num_factories:] + 1e-20

    # global (whole-batch) normalisation, as in the PyTorch deterministic branch
    inventory_act = conc / (jnp.sum(conc) + 1e-20)                       # [B, nn]
    order_act = (alpha / (alpha + beta)) * jnp.asarray(high, jnp.float32)  # [B, nf]
    # deterministic=True path: log-probs are None
    return inventory_act, order_act, None, None


def ref_forward(x, edge_index, params, high, *, nnodes, num_factories):
    """Pure-JAX f32 reference matching the PyTorch deterministic forward."""
    src, dst = edge_index[0], edge_index[1]
    N = x.shape[0]
    H = params["w2"].shape[1]
    tmp = jnp.concatenate([x[src], x[dst]], axis=1)
    h = jnp.maximum(tmp @ params["w1"] + params["b1"], 0.0)
    msg = h @ params["w2"] + params["b2"]
    agg = jnp.zeros((N, H), jnp.float32).at[src].add(msg)
    xpp = jnp.concatenate([x, agg], axis=1)
    B = N // nnodes
    xpp_r = xpp.reshape(B, nnodes, -1)
    alpha = jax.nn.softplus(
        (xpp_r[:, -num_factories:] @ params["wmu"] + params["bmu"]).squeeze(-1) + 1e-20)
    beta = jax.nn.softplus(
        (xpp_r[:, -num_factories:] @ params["wsig"] + params["bsig"]).squeeze(-1) + 1e-20)
    conc = jax.nn.softplus((xpp_r @ params["wc"] + params["bc"]) + 1e-10).squeeze(-1)
    inv = conc / (conc.sum() + 1e-20)
    alpha = alpha + 1e-20
    beta = beta + 1e-20
    order_act = alpha / (alpha + beta) * high
    return inv, order_act


if __name__ == "__main__":
    node_size, hidden_dim = 4, 32
    nnodes, num_factories = 4, 3

    key = jax.random.PRNGKey(0)
    keys = jax.random.split(key, 8)

    def lin(k, fan_in, fan_out):
        # deterministic init mimicking nn.Linear (stored as [in, out])
        bound = 1.0 / (fan_in ** 0.5)
        kw, kb = jax.random.split(k)
        w = jax.random.uniform(kw, (fan_in, fan_out), jnp.float32, -bound, bound)
        b = jax.random.uniform(kb, (fan_out,), jnp.float32, -bound, bound)
        return w, b

    w1, b1 = lin(keys[0], 2 * node_size, hidden_dim)      # EdgeConv mlp[0]
    w2, b2 = lin(keys[1], hidden_dim, hidden_dim)         # EdgeConv mlp[2]
    wc, bc = lin(keys[2], node_size + hidden_dim, 1)      # h_to_concentration
    wmu, bmu = lin(keys[3], node_size + hidden_dim, 1)    # h_to_mu
    wsig, bsig = lin(keys[4], node_size + hidden_dim, 1)  # h_to_sigma
    params = dict(w1=w1, b1=b1, w2=w2, b2=b2, wc=wc, bc=bc,
                  wmu=wmu, bmu=bmu, wsig=wsig, bsig=bsig)

    high = jnp.array([10.0, 20.0, 30.0], jnp.float32)     # self.high

    def batched_edge_index(B):
        # fully-connected directed edges (no self-loops) inside each graph
        edges = []
        for b in range(B):
            for i in range(nnodes):
                for j in range(nnodes):
                    if i != j:
                        edges.append((b * nnodes + i, b * nnodes + j))
        return jnp.array(edges, dtype=jnp.int32).T        # [2, E]

    # case 1/2: f32 compute path -> exact-algebra verification (tight tolerance)
    # case 3:   bf16 compute path (perf default) -> loose tolerance (bf16 matmuls
    #           + bf16 output store introduce ~1e-2 relative error)
    cases = [
        (2, jnp.float32, 1e-4, 1e-4),     # single tile (padded to 16 rows), grid=(1,)
        (64, jnp.float32, 1e-4, 1e-4),    # gt=32 -> grid=(2,), exercises the pipeline
        (64, jnp.bfloat16, 1e-1, 1e-3),   # bf16 perf path, grid=(2,)
    ]
    for B, cdt, rtol, atol in cases:
        N = B * nnodes
        x = jax.random.normal(jax.random.fold_in(keys[5], B),
                              (N, node_size), jnp.float32)
        edge_index = batched_edge_index(B)

        inv, order_act, order_lp, dir_lp = actor_forward(
            x, edge_index, params, high,
            nnodes=nnodes, num_factories=num_factories, compute_dtype=cdt)
        jax.block_until_ready((inv, order_act))

        inv_ref, ord_ref = ref_forward(
            x, edge_index, params, high, nnodes=nnodes, num_factories=num_factories)

        assert inv.shape == (B, nnodes) and order_act.shape == (B, num_factories)
        assert order_lp is None and dir_lp is None
        assert jnp.allclose(inv, inv_ref, rtol=rtol, atol=atol), (B, str(cdt))
        assert jnp.allclose(order_act, ord_ref, rtol=rtol, atol=atol), (B, str(cdt))

    print("KERNEL_OK")
</pallas_src>

<mosaic_0001>
module attributes {stable_mosaic.version = 11 : i64} {
  func.func @actor_kernel(%arg0: i32, %arg1: memref<16x16xf32, #tpu.memory_space<vmem>>, %arg2: memref<16x512xf32, #tpu.memory_space<vmem>>, %arg3: memref<1x512xf32, #tpu.memory_space<vmem>>, %arg4: memref<384x128xf32, #tpu.memory_space<vmem>>, %arg5: memref<16x128xf32, #tpu.memory_space<vmem>>) attributes {dimension_semantics = [#tpu.dimension_semantics<parallel>], iteration_bounds = array<i64: 1>, scalar_prefetch = 0 : i64, scratch_operands = 0 : i64, tpu.core_type = #tpu.core_type<tc>, window_params = [{transform_indices = @transform_0, window_bounds = array<i64: 16, 16>}, {pipeline_mode = #tpu.pipeline_mode<synchronous>, transform_indices = @transform_1, window_bounds = array<i64: 16, 512>}, {pipeline_mode = #tpu.pipeline_mode<synchronous>, transform_indices = @transform_2, window_bounds = array<i64: 1, 512>}, {pipeline_mode = #tpu.pipeline_mode<synchronous>, transform_indices = @transform_3, window_bounds = array<i64: 384, 128>}, {transform_indices = @transform_4, window_bounds = array<i64: 16, 128>}]} {
    %c0 = arith.constant 0 : index
    %c0_0 = arith.constant 0 : index
    %0 = vector.load %arg1[%c0, %c0_0] : memref<16x16xf32, #tpu.memory_space<vmem>>, vector<16x16xf32>
    %c0_1 = arith.constant 0 : index
    %c0_2 = arith.constant 0 : index
    %1 = vector.load %arg2[%c0_1, %c0_2] : memref<16x512xf32, #tpu.memory_space<vmem>>, vector<16x512xf32>
    %cst = arith.constant dense<0.000000e+00> : vector<16x512xf32>
    %2 = tpu.matmul %0, %1, %cst {dimension_numbers = #tpu.dot_dimension_numbers<[1], [0], [0], [1], [0, 0, 1, 1], [], []>} : vector<16x16xf32>, vector<16x512xf32>, vector<16x512xf32> -> vector<16x512xf32>
    %c0_3 = arith.constant 0 : index
    %c0_4 = arith.constant 0 : index
    %3 = vector.load %arg3[%c0_3, %c0_4] : memref<1x512xf32, #tpu.memory_space<vmem>>, vector<1x512xf32>
    %4 = vector.broadcast %3 : vector<1x512xf32> to vector<16x512xf32>
    %5 = arith.addf %2, %4 : vector<16x512xf32>
    %6 = vector.extract_strided_slice %5 {offsets = [0, 0], sizes = [16, 384], strides = [1, 1]} : vector<16x512xf32> to vector<16x384xf32>
    %cst_5 = arith.constant 0.000000e+00 : f32
    %7 = vector.broadcast %cst_5 : f32 to vector<16x384xf32>
    %8 = arith.maximumf %6, %7 : vector<16x384xf32>
    %9 = vector.extract_strided_slice %5 {offsets = [0, 384], sizes = [16, 128], strides = [1, 1]} : vector<16x512xf32> to vector<16x128xf32>
    %c0_6 = arith.constant 0 : index
    %c0_7 = arith.constant 0 : index
    %10 = vector.load %arg4[%c0_6, %c0_7] : memref<384x128xf32, #tpu.memory_space<vmem>>, vector<384x128xf32>
    %cst_8 = arith.constant dense<0.000000e+00> : vector<16x128xf32>
    %11 = tpu.matmul %8, %10, %cst_8 {dimension_numbers = #tpu.dot_dimension_numbers<[1], [0], [0], [1], [0, 0, 1, 1], [], []>} : vector<16x384xf32>, vector<384x128xf32>, vector<16x128xf32> -> vector<16x128xf32>
    %12 = arith.addf %9, %11 : vector<16x128xf32>
    %cst_9 = arith.constant 0.000000e+00 : f32
    %13 = vector.broadcast %cst_9 : f32 to vector<16x128xf32>
    %14 = arith.maximumf %12, %13 : vector<16x128xf32>
    %15 = math.absf %12 : vector<16x128xf32>
    %cst_10 = arith.constant 0.000000e+00 : f32
    %16 = vector.broadcast %cst_10 : f32 to vector<16x128xf32>
    %17 = arith.subf %16, %15 : vector<16x128xf32>
    %18 = math.exp %17 : vector<16x128xf32>
    %19 = math.log1p %18 : vector<16x128xf32>
    %20 = arith.addf %14, %19 : vector<16x128xf32>
    %c0_11 = arith.constant 0 : index
    %c0_12 = arith.constant 0 : index
    %21 = vector.load %arg5[%c0_11, %c0_12] : memref<16x128xf32, #tpu.memory_space<vmem>>, vector<16x128xf32>
    tpu.vector_store %arg5[%c0_11, %c0_12], %20 {strides = array<i32>} : memref<16x128xf32, #tpu.memory_space<vmem>>, vector<16x128xf32>,
    return
  }
  func.func @transform_0(%arg0: i32) -> (i32, i32) {
    %c0_i32 = arith.constant 0 : i32
    %c0_i32_0 = arith.constant 0 : i32
    return %arg0, %c0_i32 : i32, i32
  }
  func.func @transform_1(%arg0: i32) -> (i32, i32) {
    %c0_i32 = arith.constant 0 : i32
    %c0_i32_0 = arith.constant 0 : i32
    %c0_i32_1 = arith.constant 0 : i32
    return %c0_i32, %c0_i32_0 : i32, i32
  }
  func.func @transform_2(%arg0: i32) -> (i32, i32) {
    %c0_i32 = arith.constant 0 : i32
    %c0_i32_0 = arith.constant 0 : i32
    %c0_i32_1 = arith.constant 0 : i32
    return %c0_i32, %c0_i32_0 : i32, i32
  }
  func.func @transform_3(%arg0: i32) -> (i32, i32) {
    %c0_i32 = arith.constant 0 : i32
    %c0_i32_0 = arith.constant 0 : i32
    %c0_i32_1 = arith.constant 0 : i32
    return %c0_i32, %c0_i32_0 : i32, i32
  }
  func.func @transform_4(%arg0: i32) -> (i32, i32) {
    %c0_i32 = arith.constant 0 : i32
    %c0_i32_0 = arith.constant 0 : i32
    return %arg0, %c0_i32 : i32, i32
  }
}

module attributes {stable_mosaic.version = 11 : i64} {
  func.func @actor_kernel(%arg0: i32, %arg1: memref<16x16xf32, #tpu.memory_space<vmem>>, %arg2: memref<16x512xf32, #tpu.memory_space<vmem>>, %arg3: memref<1x512xf32, #tpu.memory_space<vmem>>, %arg4: memref<384x128xf32, #tpu.memory_space<vmem>>, %arg5: memref<16x128xf32, #tpu.memory_space<vmem>>) attributes {dimension_semantics = [#tpu.dimension_semantics<parallel>], iteration_bounds = array<i64: 1>, scalar_prefetch = 0 : i64, scratch_operands = 0 : i64, tpu.core_type = #tpu.core_type<tc>, window_params = [{transform_indices = @transform_0, window_bounds = array<i64: 16, 16>}, {pipeline_mode = #tpu.pipeline_mode<synchronous>, transform_indices = @transform_1, window_bounds = array<i64: 16, 512>}, {pipeline_mode = #tpu.pipeline_mode<synchronous>, transform_indices = @transform_2, window_bounds = array<i64: 1, 512>}, {pipeline_mode = #tpu.pipeline_mode<synchronous>, transform_indices = @transform_3, window_bounds = array<i64: 384, 128>}, {transform_indices = @transform_4, window_bounds = array<i64: 16, 128>}]} {
    %c0 = arith.constant 0 : index
    %c0_0 = arith.constant 0 : index
    %0 = vector.load %arg1[%c0, %c0_0] : memref<16x16xf32, #tpu.memory_space<vmem>>, vector<16x16xf32>
    %c0_1 = arith.constant 0 : index
    %c0_2 = arith.constant 0 : index
    %1 = vector.load %arg2[%c0_1, %c0_2] : memref<16x512xf32, #tpu.memory_space<vmem>>, vector<16x512xf32>
    %cst = arith.constant dense<0.000000e+00> : vector<16x512xf32>
    %2 = tpu.matmul %0, %1, %cst {dimension_numbers = #tpu.dot_dimension_numbers<[1], [0], [0], [1], [0, 0, 1, 1], [], []>} : vector<16x16xf32>, vector<16x512xf32>, vector<16x512xf32> -> vector<16x512xf32>
    %c0_3 = arith.constant 0 : index
    %c0_4 = arith.constant 0 : index
    %3 = vector.load %arg3[%c0_3, %c0_4] : memref<1x512xf32, #tpu.memory_space<vmem>>, vector<1x512xf32>
    %4 = vector.broadcast %3 : vector<1x512xf32> to vector<16x512xf32>
    %5 = arith.addf %2, %4 : vector<16x512xf32>
    %6 = vector.extract_strided_slice %5 {offsets = [0, 0], sizes = [16, 384], strides = [1, 1]} : vector<16x512xf32> to vector<16x384xf32>
    %cst_5 = arith.constant 0.000000e+00 : f32
    %7 = vector.broadcast %cst_5 : f32 to vector<16x384xf32>
    %8 = arith.maximumf %6, %7 : vector<16x384xf32>
    %9 = vector.extract_strided_slice %5 {offsets = [0, 384], sizes = [16, 128], strides = [1, 1]} : vector<16x512xf32> to vector<16x128xf32>
    %c0_6 = arith.constant 0 : index
    %c0_7 = arith.constant 0 : index
    %10 = vector.load %arg4[%c0_6, %c0_7] : memref<384x128xf32, #tpu.memory_space<vmem>>, vector<384x128xf32>
    %cst_8 = arith.constant dense<0.000000e+00> : vector<16x128xf32>
    %11 = tpu.matmul %8, %10, %cst_8 {dimension_numbers = #tpu.dot_dimension_numbers<[1], [0], [0], [1], [0, 0, 1, 1], [], []>} : vector<16x384xf32>, vector<384x128xf32>, vector<16x128xf32> -> vector<16x128xf32>
    %12 = arith.addf %9, %11 : vector<16x128xf32>
    %cst_9 = arith.constant 0.000000e+00 : f32
    %13 = vector.broadcast %cst_9 : f32 to vector<16x128xf32>
    %14 = arith.maximumf %12, %13 : vector<16x128xf32>
    %15 = math.absf %12 : vector<16x128xf32>
    %cst_10 = arith.constant 0.000000e+00 : f32
    %16 = vector.broadcast %cst_10 : f32 to vector<16x128xf32>
    %17 = arith.subf %16, %15 : vector<16x128xf32>
    %18 = math.exp %17 : vector<16x128xf32>
    %19 = math.log1p %18 : vector<16x128xf32>
    %20 = arith.addf %14, %19 : vector<16x128xf32>
    %c0_11 = arith.constant 0 : index
    %c0_12 = arith.constant 0 : index
    %21 = vector.load %arg5[%c0_11, %c0_12] : memref<16x128xf32, #tpu.memory_space<vmem>>, vector<16x128xf32>
    tpu.vector_store %arg5[%c0_11, %c0_12], %20 {strides = array<i32>} : memref<16x128xf32, #tpu.memory_space<vmem>>, vector<16x128xf32>,
    return
  }
  func.func @transform_0(%arg0: i32) -> (i32, i32) {
    %c0_i32 = arith.constant 0 : i32
    %c0_i32_0 = arith.constant 0 : i32
    return %arg0, %c0_i32 : i32, i32
  }
  func.func @transform_1(%arg0: i32) -> (i32, i32) {
    %c0_i32 = arith.constant 0 : i32
    %c0_i32_0 = arith.constant 0 : i32
    %c0_i32_1 = arith.constant 0 : i32
    return %c0_i32, %c0_i32_0 : i32, i32
  }
  func.func @transform_2(%arg0: i32) -> (i32, i32) {
    %c0_i32 = arith.constant 0 : i32
    %c0_i32_0 = arith.constant 0 : i32
    %c0_i32_1 = arith.constant 0 : i32
    return %c0_i32, %c0_i32_0 : i32, i32
  }
  func.func @transform_3(%arg0: i32) -> (i32, i32) {
    %c0_i32 = arith.constant 0 : i32
    %c0_i32_0 = arith.constant 0 : i32
    %c0_i32_1 = arith.constant 0 : i32
    return %c0_i32, %c0_i32_0 : i32, i32
  }
  func.func @transform_4(%arg0: i32) -> (i32, i32) {
    %c0_i32 = arith.constant 0 : i32
    %c0_i32_0 = arith.constant 0 : i32
    return %arg0, %c0_i32 : i32, i32
  }
}

</mosaic_0001>

<llo_original>
// kernel: tpu_custom_call.1
$region0: #{tpu_custom_call.1}
  #allocation0 [shape = 'u32[]', space=smem, size = 0x4, offset = 0x4, fixed_abs, tag = 'smem constant byte address 0x4 - core index']
  #allocation1 [shape = 'u32[72,128]{1,0:T(1,128)}', space=vmem, size = 0x9000, scoped, tag = 'internal scratch']
  %s0 = inlined_call_operand.hbm [shape: f32[16,16], index: 0, kind: input, shape index: {}]
  %s1 = inlined_call_operand.hbm [shape: f32[16,512], index: 1, kind: input, shape index: {}]
  %s2 = inlined_call_operand.hbm [shape: f32[1,512], index: 2, kind: input, shape index: {}]
  %s3 = inlined_call_operand.hbm [shape: f32[384,128], index: 3, kind: input, shape index: {}]
  %s4 = inlined_call_operand.hbm [shape: f32[16,128], index: 4, kind: output, shape index: {}]
  %s5 = sld [smem:[#allocation0]]
  $region42: #{tpu_custom_call.1} parent=0
    _
  %s7 = ssub.s32 1, %s5
  %s8 = scalar_select 0, %s7, %s5
  $region1: #{tpu_custom_call.1} parent=0
    #allocation2 [shape = 'u8[8192]{0}', space=vmem, size = 0x2000, scoped, tag = 'input window, operand 0, single buffered']
    #allocation3 [shape = 's32[1]{0}', space=sflag, size = 0x4, scoped, tag = 'scoped memory for tpu_custom_call.1']
    #allocation4 [shape = 's32[1]{0}', space=sflag, size = 0x4, scoped, tag = 'scoped memory for tpu_custom_call.1']
    #allocation5 [shape = 'u8[32768]{0}', space=vmem, size = 0x8000, scoped, tag = 'input window, operand 1, single buffered']
    #allocation6 [shape = 's32[1]{0}', space=sflag, size = 0x4, scoped, tag = 'scoped memory for tpu_custom_call.1']
    #allocation7 [shape = 'u8[2048]{0}', space=vmem, size = 0x800, scoped, tag = 'input window, operand 2, single buffered']
    #allocation8 [shape = 'u8[196608]{0}', space=vmem, size = 0x30000, scoped, tag = 'input window, operand 3, single buffered']
    #allocation9 [shape = 's32[1]{0}', space=sflag, size = 0x4, scoped, tag = 'scoped memory for tpu_custom_call.1']
    #allocation10 [shape = 'u8[8192]{0}', space=vmem, size = 0x2000, scoped, tag = 'output window, operand 0, single buffered']
    %9 = vsyncpa [#allocation3], 0
    %10 = vsyncpa [#allocation6], 0
    %11 = vsyncpa [#allocation9], 0
    %12 = vsyncpa [#allocation4], 0
    // Predicated region
    $region2: #{tpu_custom_call.1} parent=1 // pred_check
      _
    $region3: #{tpu_custom_call.1} parent=1 // pred_check_branch
      %14 = sbr.rel (0) target = $region5
    $region4: #{tpu_custom_call.1} parent=1 // pred_region
      %16 = vsyncadd [#allocation3], 0
      %s17 = sshll.u32 %s0, 4
      %s18 = int_to_ptr.hbm [resolvable:$true] %s17
      %s19 = sshll.u32 [#allocation2], 4
      %s20 = int_to_ptr.vmem [resolvable:$true] %s19
      %25 = dma.hbm_to_vmem [thread:$0]  %s18, 256, %s20, [#allocation3], 128, 128, 8
    $region5: #{tpu_custom_call.1} parent=1 // pred_fallthru
      _
    // Predicated region
    $region6: #{tpu_custom_call.1} parent=1 // pred_check
      _
    $region7: #{tpu_custom_call.1} parent=1 // pred_check_branch
      %27 = sbr.rel (0) target = $region9
    $region8: #{tpu_custom_call.1} parent=1 // pred_region
      %29 = vsyncadd [#allocation6], 0
      %s30 = sshll.u32 %s1, 4
      %s31 = int_to_ptr.hbm [resolvable:$true] %s30
      %s32 = sshll.u32 [#allocation5], 4
      %s33 = int_to_ptr.vmem [resolvable:$true] %s32
      %38 = dma.hbm_to_vmem [thread:$0]  %s31, 1024, %s33, [#allocation6], 512, 512, 32
    $region9: #{tpu_custom_call.1} parent=1 // pred_fallthru
      _
    // Predicated region
    $region10: #{tpu_custom_call.1} parent=1 // pred_check
      _
    $region11: #{tpu_custom_call.1} parent=1 // pred_check_branch
      %40 = sbr.rel (0) target = $region13
    $region12: #{tpu_custom_call.1} parent=1 // pred_region
      %42 = vsyncadd [#allocation6], 0
      %s44 = sshll.u32 %s2, 4
      %s45 = int_to_ptr.hbm [resolvable:$true] %s44
      %s46 = sshll.u32 [#allocation7], 4
      %s47 = int_to_ptr.vmem [resolvable:$true] %s46
      %49 = dma.hbm_to_vmem [thread:$0]  %s45, 64, %s47, [#allocation6]
    $region13: #{tpu_custom_call.1} parent=1 // pred_fallthru
      _
    // Predicated region
    $region14: #{tpu_custom_call.1} parent=1 // pred_check
      _
    $region15: #{tpu_custom_call.1} parent=1 // pred_check_branch
      %51 = sbr.rel (0) target = $region17
    $region16: #{tpu_custom_call.1} parent=1 // pred_region
      %53 = vsyncadd [#allocation9], 0
      %s54 = sshll.u32 %s3, 4
      %s55 = int_to_ptr.hbm [resolvable:$true] %s54
      %s56 = sshll.u32 [#allocation8], 4
      %s57 = int_to_ptr.vmem [resolvable:$true] %s56
      %62 = dma.hbm_to_vmem [thread:$0]  %s55, 6144, %s57, [#allocation9], 128, 128, 8
    $region17: #{tpu_custom_call.1} parent=1 // pred_fallthru
      _
    // Predicated region
    $region18: #{tpu_custom_call.1} parent=1 // pred_check
      _
    $region19: #{tpu_custom_call.1} parent=1 // pred_check_branch
      %64 = sbr.rel (0) target = $region21
    $region20: #{tpu_custom_call.1} parent=1 // pred_region
      %66 = dma.done [#allocation3], 256
    $region21: #{tpu_custom_call.1} parent=1 // pred_fallthru
      _
    // Predicated region
    $region22: #{tpu_custom_call.1} parent=1 // pred_check
      _
    $region23: #{tpu_custom_call.1} parent=1 // pred_check_branch
      %68 = sbr.rel (0) target = $region25
    $region24: #{tpu_custom_call.1} parent=1 // pred_region
      %70 = dma.done [#allocation6], 1024
    $region25: #{tpu_custom_call.1} parent=1 // pred_fallthru
      _
    // Predicated region
    $region26: #{tpu_custom_call.1} parent=1 // pred_check
      _
    $region27: #{tpu_custom_call.1} parent=1 // pred_check_branch
      %72 = sbr.rel (0) target = $region29
    $region28: #{tpu_custom_call.1} parent=1 // pred_region
      %74 = dma.done [#allocation6], 64
    $region29: #{tpu_custom_call.1} parent=1 // pred_fallthru
      _
    // Predicated region
    $region30: #{tpu_custom_call.1} parent=1 // pred_check
      _
    $region31: #{tpu_custom_call.1} parent=1 // pred_check_branch
      %76 = sbr.rel (0) target = $region33
    $region32: #{tpu_custom_call.1} parent=1 // pred_region
      %78 = dma.done [#allocation9], 6144
    $region33: #{tpu_custom_call.1} parent=1 // pred_fallthru
      _
    %v79 = vld [vmem:[#allocation2] sm:$0xff]
    %v80 = vld [vmem:[#allocation2 + $0x8] sm:$0xff]
    %v81 = vld [vmem:[#allocation5] sm:$0xff]
    %v82 = vld [vmem:[#allocation5 + $0x8] sm:$0xff]
    %v83 = vld [vmem:[#allocation5 + $0x10] sm:$0xff]
    %v84 = vld [vmem:[#allocation5 + $0x18] sm:$0xff]
    %v85 = vld [vmem:[#allocation5 + $0x20] sm:$0xff]
    %v86 = vld [vmem:[#allocation5 + $0x28] sm:$0xff]
    %v87 = vld [vmem:[#allocation5 + $0x30] sm:$0xff]
    %v88 = vld [vmem:[#allocation5 + $0x38] sm:$0xff]
    %v89 = vld [vmem:[#allocation7] sm:$0xf]
    %v91 = vperm.slane %v89, 0
    %v92 = vperm.slane %v89, 1
    %v93 = vperm.slane %v89, 2
    %v94 = vperm.slane %v89, 3
    %vm99 = vcmask 130048
    %v101 = vsel %vm99, %v79, 0
    %v104 = vsel %vm99, %v80, 0
    %106 = vmatpush.msra.mxu0 0.0
    %107 = vmatpush.msra.mxu0 0.0
    %108 = vmatpush.msra.mxu0 0.0
    %109 = vmatpush.msra.mxu0 0.0
    %110 = vmatpush.msra.mxu0 0.0
    %111 = vmatpush.msra.mxu0 0.0
    %112 = vmatpush.msra.mxu0 0.0
    %113 = vmatpush.msra.mxu0 0.0
    %114 = vmatpush.msra.mxu0 0.0
    %115 = vmatpush.msra.mxu0 0.0
    %116 = vmatpush.msra.mxu0 0.0
    %117 = vmatpush.msra.mxu0 0.0
    %118 = vmatpush.msra.mxu0 0.0
    %119 = vmatpush.msra.mxu0 0.0
    %120 = vmatpush.msra.mxu0 %v85
    %121 = vmatpush.msra.mxu0 %v81
    %122 = vmatmul.f32.gmra.mxu0 %v101
    %v123 = vpop.f32.mrf.mxu0
    %v124 = vadd.f32 %v91, %v123
    %125 = vmatmul.f32.gmra.mxu0 %v104
    %v126 = vpop.f32.mrf.mxu0
    %v127 = vadd.f32 %v91, %v126
    %128 = vdwg.mxu0
    %129 = vmatpush.msra.mxu0 0.0
    %130 = vmatpush.msra.mxu0 0.0
    %131 = vmatpush.msra.mxu0 0.0
    %132 = vmatpush.msra.mxu0 0.0
    %133 = vmatpush.msra.mxu0 0.0
    %134 = vmatpush.msra.mxu0 0.0
    %135 = vmatpush.msra.mxu0 0.0
    %136 = vmatpush.msra.mxu0 0.0
    %137 = vmatpush.msra.mxu0 0.0
    %138 = vmatpush.msra.mxu0 0.0
    %139 = vmatpush.msra.mxu0 0.0
    %140 = vmatpush.msra.mxu0 0.0
    %141 = vmatpush.msra.mxu0 0.0
    %142 = vmatpush.msra.mxu0 0.0
    %143 = vmatpush.msra.mxu0 %v86
    %144 = vmatpush.msra.mxu0 %v82
    %145 = vmatmul.f32.gmra.mxu0 %v101
    %v146 = vpop.f32.mrf.mxu0
    %v147 = vadd.f32 %v92, %v146
    %148 = vmatmul.f32.gmra.mxu0 %v104
    %v149 = vpop.f32.mrf.mxu0
    %v150 = vadd.f32 %v92, %v149
    %151 = vdwg.mxu0
    %152 = vmatpush.msra.mxu0 0.0
    %153 = vmatpush.msra.mxu0 0.0
    %154 = vmatpush.msra.mxu0 0.0
    %155 = vmatpush.msra.mxu0 0.0
    %156 = vmatpush.msra.mxu0 0.0
    %157 = vmatpush.msra.mxu0 0.0
    %158 = vmatpush.msra.mxu0 0.0
    %159 = vmatpush.msra.mxu0 0.0
    %160 = vmatpush.msra.mxu0 0.0
    %161 = vmatpush.msra.mxu0 0.0
    %162 = vmatpush.msra.mxu0 0.0
    %163 = vmatpush.msra.mxu0 0.0
    %164 = vmatpush.msra.mxu0 0.0
    %165 = vmatpush.msra.mxu0 0.0
    %166 = vmatpush.msra.mxu0 %v87
    %167 = vmatpush.msra.mxu0 %v83
    %168 = vmatmul.f32.gmra.mxu0 %v101
    %v169 = vpop.f32.mrf.mxu0
    %v170 = vadd.f32 %v93, %v169
    %171 = vmatmul.f32.gmra.mxu0 %v104
    %v172 = vpop.f32.mrf.mxu0
    %v173 = vadd.f32 %v93, %v172
    %174 = vdwg.mxu0
    %175 = vmatpush.msra.mxu0 0.0
    %176 = vmatpush.msra.mxu0 0.0
    %177 = vmatpush.msra.mxu0 0.0
    %178 = vmatpush.msra.mxu0 0.0
    %179 = vmatpush.msra.mxu0 0.0
    %180 = vmatpush.msra.mxu0 0.0
    %181 = vmatpush.msra.mxu0 0.0
    %182 = vmatpush.msra.mxu0 0.0
    %183 = vmatpush.msra.mxu0 0.0
    %184 = vmatpush.msra.mxu0 0.0
    %185 = vmatpush.msra.mxu0 0.0
    %186 = vmatpush.msra.mxu0 0.0
    %187 = vmatpush.msra.mxu0 0.0
    %188 = vmatpush.msra.mxu0 0.0
    %189 = vmatpush.msra.mxu0 %v88
    %190 = vmatpush.msra.mxu0 %v84
    %191 = vmatmul.f32.gmra.mxu0 %v101
    %v192 = vpop.f32.mrf.mxu0
    %v193 = vadd.f32 %v94, %v192
    %194 = vmatmul.f32.gmra.mxu0 %v104
    %v195 = vpop.f32.mrf.mxu0
    %v196 = vadd.f32 %v94, %v195
    %197 = vdwg.mxu0
    %v198 = vmax.f32 %v124, 0.0
    %v199 = vmax.f32 %v147, 0.0
    %v200 = vmax.f32 %v170, 0.0
    %v201 = vmax.f32 %v127, 0.0
    %v202 = vmax.f32 %v150, 0.0
    %v203 = vmax.f32 %v173, 0.0
    %v204 = vld [vmem:[#allocation8] sm:$0xff]
    %v205 = vld [vmem:[#allocation8 + $0x8] sm:$0xff]
    %v206 = vld [vmem:[#allocation8 + $0x10] sm:$0xff]
    %v207 = vld [vmem:[#allocation8 + $0x18] sm:$0xff]
    %v208 = vld [vmem:[#allocation8 + $0x20] sm:$0xff]
    %v209 = vld [vmem:[#allocation8 + $0x28] sm:$0xff]
    %v210 = vld [vmem:[#allocation8 + $0x30] sm:$0xff]
    %v211 = vld [vmem:[#allocation8 + $0x38] sm:$0xff]
    %v212 = vld [vmem:[#allocation8 + $0x40] sm:$0xff]
    %v213 = vld [vmem:[#allocation8 + $0x48] sm:$0xff]
    %v214 = vld [vmem:[#allocation8 + $0x50] sm:$0xff]
    %v215 = vld [vmem:[#allocation8 + $0x58] sm:$0xff]
    %v216 = vld [vmem:[#allocation8 + $0x60] sm:$0xff]
    %v217 = vld [vmem:[#allocation8 + $0x68] sm:$0xff]
    %v218 = vld [vmem:[#allocation8 + $0x70] sm:$0xff]
    %v219 = vld [vmem:[#allocation8 + $0x78] sm:$0xff]
    %v220 = vld [vmem:[#allocation8 + $0x80] sm:$0xff]
    %v221 = vld [vmem:[#allocation8 + $0x88] sm:$0xff]
    %v222 = vld [vmem:[#allocation8 + $0x90] sm:$0xff]
    %v223 = vld [vmem:[#allocation8 + $0x98] sm:$0xff]
    %v224 = vld [vmem:[#allocation8 + $0xa0] sm:$0xff]
    %v225 = vld [vmem:[#allocation8 + $0xa8] sm:$0xff]
    %v226 = vld [vmem:[#allocation8 + $0xb0] sm:$0xff]
    %v227 = vld [vmem:[#allocation8 + $0xb8] sm:$0xff]
    %v228 = vld [vmem:[#allocation8 + $0xc0] sm:$0xff]
    %v229 = vld [vmem:[#allocation8 + $0xc8] sm:$0xff]
    %v230 = vld [vmem:[#allocation8 + $0xd0] sm:$0xff]
    %v231 = vld [vmem:[#allocation8 + $0xd8] sm:$0xff]
    %v232 = vld [vmem:[#allocation8 + $0xe0] sm:$0xff]
    %v233 = vld [vmem:[#allocation8 + $0xe8] sm:$0xff]
    %v234 = vld [vmem:[#allocation8 + $0xf0] sm:$0xff]
    %v235 = vld [vmem:[#allocation8 + $0xf8] sm:$0xff]
    %v236 = vld [vmem:[#allocation8 + $0x100] sm:$0xff]
    %v237 = vld [vmem:[#allocation8 + $0x108] sm:$0xff]
    %v238 = vld [vmem:[#allocation8 + $0x110] sm:$0xff]
    %v239 = vld [vmem:[#allocation8 + $0x118] sm:$0xff]
    %v240 = vld [vmem:[#allocation8 + $0x120] sm:$0xff]
    %v241 = vld [vmem:[#allocation8 + $0x128] sm:$0xff]
    %v242 = vld [vmem:[#allocation8 + $0x130] sm:$0xff]
    %v243 = vld [vmem:[#allocation8 + $0x138] sm:$0xff]
    %v244 = vld [vmem:[#allocation8 + $0x140] sm:$0xff]
    %v245 = vld [vmem:[#allocation8 + $0x148] sm:$0xff]
    %v246 = vld [vmem:[#allocation8 + $0x150] sm:$0xff]
    %v247 = vld [vmem:[#allocation8 + $0x158] sm:$0xff]
    %v248 = vld [vmem:[#allocation8 + $0x160] sm:$0xff]
    %v249 = vld [vmem:[#allocation8 + $0x168] sm:$0xff]
    %v250 = vld [vmem:[#allocation8 + $0x170] sm:$0xff]
    %v251 = vld [vmem:[#allocation8 + $0x178] sm:$0xff]
    %252 = vmatpush.msra.mxu0 %v219
    %253 = vmatpush.msra.mxu0 %v218
    %254 = vmatpush.msra.mxu0 %v217
    %255 = vmatpush.msra.mxu0 %v216
    %256 = vmatpush.msra.mxu0 %v215
    %257 = vmatpush.msra.mxu0 %v214
    %258 = vmatpush.msra.mxu0 %v213
    %259 = vmatpush.msra.mxu0 %v212
    %260 = vmatpush.msra.mxu0 %v211
    %261 = vmatpush.msra.mxu0 %v210
    %262 = vmatpush.msra.mxu0 %v209
    %263 = vmatpush.msra.mxu0 %v208
    %264 = vmatpush.msra.mxu0 %v207
    %265 = vmatpush.msra.mxu0 %v206
    %266 = vmatpush.msra.mxu0 %v205
    %267 = vmatpush.msra.mxu0 %v204
    %268 = vmatmul.f32.gmra.mxu0 %v198
    %v269 = vpop.f32.mrf.mxu0
    %v270 = vadd.f32 0.0, %v269
    %271 = vmatmul.f32.gmra.mxu0 %v201
    %v272 = vpop.f32.mrf.mxu0
    %v273 = vadd.f32 0.0, %v272
    %274 = vdwg.mxu0
    %275 = vmatpush.msra.mxu0 %v235
    %276 = vmatpush.msra.mxu0 %v234
    %277 = vmatpush.msra.mxu0 %v233
    %278 = vmatpush.msra.mxu0 %v232
    %279 = vmatpush.msra.mxu0 %v231
    %280 = vmatpush.msra.mxu0 %v230
    %281 = vmatpush.msra.mxu0 %v229
    %282 = vmatpush.msra.mxu0 %v228
    %283 = vmatpush.msra.mxu0 %v227
    %284 = vmatpush.msra.mxu0 %v226
    %285 = vmatpush.msra.mxu0 %v225
    %286 = vmatpush.msra.mxu0 %v224
    %287 = vmatpush.msra.mxu0 %v223
    %288 = vmatpush.msra.mxu0 %v222
    %289 = vmatpush.msra.mxu0 %v221
    %290 = vmatpush.msra.mxu0 %v220
    %291 = vmatmul.f32.gmra.mxu0 %v199
    %v292 = vpop.f32.mrf.mxu0
    %v293 = vadd.f32 %v270, %v292
    %294 = vmatmul.f32.gmra.mxu0 %v202
    %v295 = vpop.f32.mrf.mxu0
    %v296 = vadd.f32 %v273, %v295
    %297 = vdwg.mxu0
    %298 = vmatpush.msra.mxu0 %v251
    %299 = vmatpush.msra.mxu0 %v250
    %300 = vmatpush.msra.mxu0 %v249
    %301 = vmatpush.msra.mxu0 %v248
    %302 = vmatpush.msra.mxu0 %v247
    %303 = vmatpush.msra.mxu0 %v246
    %304 = vmatpush.msra.mxu0 %v245
    %305 = vmatpush.msra.mxu0 %v244
    %306 = vmatpush.msra.mxu0 %v243
    %307 = vmatpush.msra.mxu0 %v242
    %308 = vmatpush.msra.mxu0 %v241
    %309 = vmatpush.msra.mxu0 %v240
    %310 = vmatpush.msra.mxu0 %v239
    %311 = vmatpush.msra.mxu0 %v238
    %312 = vmatpush.msra.mxu0 %v237
    %313 = vmatpush.msra.mxu0 %v236
    %314 = vmatmul.f32.gmra.mxu0 %v200
    %v315 = vpop.f32.mrf.mxu0
    %v316 = vadd.f32 %v293, %v315
    %317 = vmatmul.f32.gmra.mxu0 %v203
    %v318 = vpop.f32.mrf.mxu0
    %v319 = vadd.f32 %v296, %v318
    %320 = vdwg.mxu0
    %v321 = vadd.f32 %v193, %v316
    %v322 = vadd.f32 %v196, %v319
    %v323 = vmax.f32 %v321, 0.0
    %v324 = vmax.f32 %v322, 0.0
    %v325 = vand.u32 2147483647, %v321
    %v326 = vand.u32 2147483647, %v322
    %v327 = vsub.f32 0.0, %v325
    %v328 = vsub.f32 0.0, %v326
    %v329 = vmul.f32 %v327, 1.442695
    %v330 = vpow.pop %v329
    %v331 = vmul.f32 %v328, 1.442695
    %v332 = vpow.pop %v331
    %v333 = vadd.f32 %v330, 1.0
    %v334 = vlog2.pop %v333
    %v335 = vmul.f32 %v334, 0.6931472
    %v336 = vmul.f32 -0.5, %v330
    %v337 = vadd.f32 %v336, 1.0
    %v338 = vmul.f32 %v337, %v330
    %v339 = vand.u32 2147483647, %v330
    %vm340 = vcmp.lt.f32.partialorder %v339, 0.0004427343
    %v341 = vsel %vm340, %v338, %v335
    %v342 = vadd.f32 %v332, 1.0
    %v343 = vlog2.pop %v342
    %v344 = vmul.f32 %v343, 0.6931472
    %v345 = vmul.f32 -0.5, %v332
    %v346 = vadd.f32 %v345, 1.0
    %v347 = vmul.f32 %v346, %v332
    %v348 = vand.u32 2147483647, %v332
    %vm349 = vcmp.lt.f32.partialorder %v348, 0.0004427343
    %v350 = vsel %vm349, %v347, %v344
    %v351 = vadd.f32 %v323, %v341
    %v352 = vadd.f32 %v324, %v350
    %353 = vst [vmem:[#allocation10] sm:$0xff] %v351
    %354 = vst [vmem:[#allocation10 + $0x8] sm:$0xff] %v352
    // Predicated region
    $region34: #{tpu_custom_call.1} parent=1 // pred_check
      _
    $region35: #{tpu_custom_call.1} parent=1 // pred_check_branch
      %356 = sbr.rel (0) target = $region37
    $region36: #{tpu_custom_call.1} parent=1 // pred_region
      %358 = vsyncadd [#allocation4], 0
      %s359 = sshll.u32 [#allocation10], 4
      %s360 = int_to_ptr.vmem [resolvable:$true] %s359
      %s361 = sshll.u32 %s4, 4
      %s362 = int_to_ptr.hbm [resolvable:$true] %s361
      %367 = dma.vmem_to_hbm [thread:$0]  %s360, 256, %s362, [#allocation4], 128, 128, 8
    $region37: #{tpu_custom_call.1} parent=1 // pred_fallthru
      _
    // Predicated region
    $region38: #{tpu_custom_call.1} parent=1 // pred_check
      _
    $region39: #{tpu_custom_call.1} parent=1 // pred_check_branch
      %369 = sbr.rel (0) target = $region41
    $region40: #{tpu_custom_call.1} parent=1 // pred_region
      %371 = dma.done [#allocation4], 256
    $region41: #{tpu_custom_call.1} parent=1 // pred_fallthru
      _
    %372 = vsyncpa [#allocation3], 1
    %373 = vsyncpa [#allocation6], 1
    %374 = vsyncpa [#allocation9], 1
    %375 = vsyncpa [#allocation4], 1

// kernel: tpu_custom_call.1
$region0: #{tpu_custom_call.1}
  #allocation0 [shape = 'u32[]', space=smem, size = 0x4, offset = 0x4, fixed_abs, tag = 'smem constant byte address 0x4 - core index']
  #allocation1 [shape = 'u32[72,128]{1,0:T(1,128)}', space=vmem, size = 0x9000, scoped, tag = 'internal scratch']
  %s0 = inlined_call_operand.hbm [shape: f32[16,16], index: 0, kind: input, shape index: {}]
  %s1 = inlined_call_operand.hbm [shape: f32[16,512], index: 1, kind: input, shape index: {}]
  %s2 = inlined_call_operand.hbm [shape: f32[1,512], index: 2, kind: input, shape index: {}]
  %s3 = inlined_call_operand.hbm [shape: f32[384,128], index: 3, kind: input, shape index: {}]
  %s4 = inlined_call_operand.hbm [shape: f32[16,128], index: 4, kind: output, shape index: {}]
  %s5 = sld [smem:[#allocation0]]
  $region42: #{tpu_custom_call.1} parent=0
    _
  %s7 = ssub.s32 1, %s5
  %s8 = scalar_select 0, %s7, %s5
  $region1: #{tpu_custom_call.1} parent=0
    #allocation2 [shape = 'u8[8192]{0}', space=vmem, size = 0x2000, scoped, tag = 'input window, operand 0, single buffered']
    #allocation3 [shape = 's32[1]{0}', space=sflag, size = 0x4, scoped, tag = 'scoped memory for tpu_custom_call.1']
    #allocation4 [shape = 's32[1]{0}', space=sflag, size = 0x4, scoped, tag = 'scoped memory for tpu_custom_call.1']
    #allocation5 [shape = 'u8[32768]{0}', space=vmem, size = 0x8000, scoped, tag = 'input window, operand 1, single buffered']
    #allocation6 [shape = 's32[1]{0}', space=sflag, size = 0x4, scoped, tag = 'scoped memory for tpu_custom_call.1']
    #allocation7 [shape = 'u8[2048]{0}', space=vmem, size = 0x800, scoped, tag = 'input window, operand 2, single buffered']
    #allocation8 [shape = 'u8[196608]{0}', space=vmem, size = 0x30000, scoped, tag = 'input window, operand 3, single buffered']
    #allocation9 [shape = 's32[1]{0}', space=sflag, size = 0x4, scoped, tag = 'scoped memory for tpu_custom_call.1']
    #allocation10 [shape = 'u8[8192]{0}', space=vmem, size = 0x2000, scoped, tag = 'output window, operand 0, single buffered']
    %9 = vsyncpa [#allocation3], 0
    %10 = vsyncpa [#allocation6], 0
    %11 = vsyncpa [#allocation9], 0
    %12 = vsyncpa [#allocation4], 0
    // Predicated region
    $region2: #{tpu_custom_call.1} parent=1 // pred_check
      _
    $region3: #{tpu_custom_call.1} parent=1 // pred_check_branch
      %14 = sbr.rel (0) target = $region5
    $region4: #{tpu_custom_call.1} parent=1 // pred_region
      %16 = vsyncadd [#allocation3], 0
      %s17 = sshll.u32 %s0, 4
      %s18 = int_to_ptr.hbm [resolvable:$true] %s17
      %s19 = sshll.u32 [#allocation2], 4
      %s20 = int_to_ptr.vmem [resolvable:$true] %s19
      %25 = dma.hbm_to_vmem [thread:$0]  %s18, 256, %s20, [#allocation3], 128, 128, 8
    $region5: #{tpu_custom_call.1} parent=1 // pred_fallthru
      _
    // Predicated region
    $region6: #{tpu_custom_call.1} parent=1 // pred_check
      _
    $region7: #{tpu_custom_call.1} parent=1 // pred_check_branch
      %27 = sbr.rel (0) target = $region9
    $region8: #{tpu_custom_call.1} parent=1 // pred_region
      %29 = vsyncadd [#allocation6], 0
      %s30 = sshll.u32 %s1, 4
      %s31 = int_to_ptr.hbm [resolvable:$true] %s30
      %s32 = sshll.u32 [#allocation5], 4
      %s33 = int_to_ptr.vmem [resolvable:$true] %s32
      %38 = dma.hbm_to_vmem [thread:$0]  %s31, 1024, %s33, [#allocation6], 512, 512, 32
    $region9: #{tpu_custom_call.1} parent=1 // pred_fallthru
      _
    // Predicated region
    $region10: #{tpu_custom_call.1} parent=1 // pred_check
      _
    $region11: #{tpu_custom_call.1} parent=1 // pred_check_branch
      %40 = sbr.rel (0) target = $region13
    $region12: #{tpu_custom_call.1} parent=1 // pred_region
      %42 = vsyncadd [#allocation6], 0
      %s44 = sshll.u32 %s2, 4
      %s45 = int_to_ptr.hbm [resolvable:$true] %s44
      %s46 = sshll.u32 [#allocation7], 4
      %s47 = int_to_ptr.vmem [resolvable:$true] %s46
      %49 = dma.hbm_to_vmem [thread:$0]  %s45, 64, %s47, [#allocation6]
    $region13: #{tpu_custom_call.1} parent=1 // pred_fallthru
      _
    // Predicated region
    $region14: #{tpu_custom_call.1} parent=1 // pred_check
      _
    $region15: #{tpu_custom_call.1} parent=1 // pred_check_branch
      %51 = sbr.rel (0) target = $region17
    $region16: #{tpu_custom_call.1} parent=1 // pred_region
      %53 = vsyncadd [#allocation9], 0
      %s54 = sshll.u32 %s3, 4
      %s55 = int_to_ptr.hbm [resolvable:$true] %s54
      %s56 = sshll.u32 [#allocation8], 4
      %s57 = int_to_ptr.vmem [resolvable:$true] %s56
      %62 = dma.hbm_to_vmem [thread:$0]  %s55, 6144, %s57, [#allocation9], 128, 128, 8
    $region17: #{tpu_custom_call.1} parent=1 // pred_fallthru
      _
    // Predicated region
    $region18: #{tpu_custom_call.1} parent=1 // pred_check
      _
    $region19: #{tpu_custom_call.1} parent=1 // pred_check_branch
      %64 = sbr.rel (0) target = $region21
    $region20: #{tpu_custom_call.1} parent=1 // pred_region
      %66 = dma.done [#allocation3], 256
    $region21: #{tpu_custom_call.1} parent=1 // pred_fallthru
      _
    // Predicated region
    $region22: #{tpu_custom_call.1} parent=1 // pred_check
      _
    $region23: #{tpu_custom_call.1} parent=1 // pred_check_branch
      %68 = sbr.rel (0) target = $region25
    $region24: #{tpu_custom_call.1} parent=1 // pred_region
      %70 = dma.done [#allocation6], 1024
    $region25: #{tpu_custom_call.1} parent=1 // pred_fallthru
      _
    // Predicated region
    $region26: #{tpu_custom_call.1} parent=1 // pred_check
      _
    $region27: #{tpu_custom_call.1} parent=1 // pred_check_branch
      %72 = sbr.rel (0) target = $region29
    $region28: #{tpu_custom_call.1} parent=1 // pred_region
      %74 = dma.done [#allocation6], 64
    $region29: #{tpu_custom_call.1} parent=1 // pred_fallthru
      _
    // Predicated region
    $region30: #{tpu_custom_call.1} parent=1 // pred_check
      _
    $region31: #{tpu_custom_call.1} parent=1 // pred_check_branch
      %76 = sbr.rel (0) target = $region33
    $region32: #{tpu_custom_call.1} parent=1 // pred_region
      %78 = dma.done [#allocation9], 6144
    $region33: #{tpu_custom_call.1} parent=1 // pred_fallthru
      _
    %v79 = vld [vmem:[#allocation2] sm:$0xff]
    %v80 = vld [vmem:[#allocation2 + $0x8] sm:$0xff]
    %v81 = vld [vmem:[#allocation5] sm:$0xff]
    %v82 = vld [vmem:[#allocation5 + $0x8] sm:$0xff]
    %v83 = vld [vmem:[#allocation5 + $0x10] sm:$0xff]
    %v84 = vld [vmem:[#allocation5 + $0x18] sm:$0xff]
    %v85 = vld [vmem:[#allocation5 + $0x20] sm:$0xff]
    %v86 = vld [vmem:[#allocation5 + $0x28] sm:$0xff]
    %v87 = vld [vmem:[#allocation5 + $0x30] sm:$0xff]
    %v88 = vld [vmem:[#allocation5 + $0x38] sm:$0xff]
    %v89 = vld [vmem:[#allocation7] sm:$0xf]
    %v91 = vperm.slane %v89, 0
    %v92 = vperm.slane %v89, 1
    %v93 = vperm.slane %v89, 2
    %v94 = vperm.slane %v89, 3
    %vm99 = vcmask 130048
    %v101 = vsel %vm99, %v79, 0
    %v104 = vsel %vm99, %v80, 0
    %106 = vmatpush.msra.mxu0 0.0
    %107 = vmatpush.msra.mxu0 0.0
    %108 = vmatpush.msra.mxu0 0.0
    %109 = vmatpush.msra.mxu0 0.0
    %110 = vmatpush.msra.mxu0 0.0
    %111 = vmatpush.msra.mxu0 0.0
    %112 = vmatpush.msra.mxu0 0.0
    %113 = vmatpush.msra.mxu0 0.0
    %114 = vmatpush.msra.mxu0 0.0
    %115 = vmatpush.msra.mxu0 0.0
    %116 = vmatpush.msra.mxu0 0.0
    %117 = vmatpush.msra.mxu0 0.0
    %118 = vmatpush.msra.mxu0 0.0
    %119 = vmatpush.msra.mxu0 0.0
    %120 = vmatpush.msra.mxu0 %v85
    %121 = vmatpush.msra.mxu0 %v81
    %122 = vmatmul.f32.gmra.mxu0 %v101
    %v123 = vpop.f32.mrf.mxu0
    %v124 = vadd.f32 %v91, %v123
    %125 = vmatmul.f32.gmra.mxu0 %v104
    %v126 = vpop.f32.mrf.mxu0
    %v127 = vadd.f32 %v91, %v126
    %128 = vdwg.mxu0
    %129 = vmatpush.msra.mxu0 0.0
    %130 = vmatpush.msra.mxu0 0.0
    %131 = vmatpush.msra.mxu0 0.0
    %132 = vmatpush.msra.mxu0 0.0
    %133 = vmatpush.msra.mxu0 0.0
    %134 = vmatpush.msra.mxu0 0.0
    %135 = vmatpush.msra.mxu0 0.0
    %136 = vmatpush.msra.mxu0 0.0
    %137 = vmatpush.msra.mxu0 0.0
    %138 = vmatpush.msra.mxu0 0.0
    %139 = vmatpush.msra.mxu0 0.0
    %140 = vmatpush.msra.mxu0 0.0
    %141 = vmatpush.msra.mxu0 0.0
    %142 = vmatpush.msra.mxu0 0.0
    %143 = vmatpush.msra.mxu0 %v86
    %144 = vmatpush.msra.mxu0 %v82
    %145 = vmatmul.f32.gmra.mxu0 %v101
    %v146 = vpop.f32.mrf.mxu0
    %v147 = vadd.f32 %v92, %v146
    %148 = vmatmul.f32.gmra.mxu0 %v104
    %v149 = vpop.f32.mrf.mxu0
    %v150 = vadd.f32 %v92, %v149
    %151 = vdwg.mxu0
    %152 = vmatpush.msra.mxu0 0.0
    %153 = vmatpush.msra.mxu0 0.0
    %154 = vmatpush.msra.mxu0 0.0
    %155 = vmatpush.msra.mxu0 0.0
    %156 = vmatpush.msra.mxu0 0.0
    %157 = vmatpush.msra.mxu0 0.0
    %158 = vmatpush.msra.mxu0 0.0
    %159 = vmatpush.msra.mxu0 0.0
    %160 = vmatpush.msra.mxu0 0.0
    %161 = vmatpush.msra.mxu0 0.0
    %162 = vmatpush.msra.mxu0 0.0
    %163 = vmatpush.msra.mxu0 0.0
    %164 = vmatpush.msra.mxu0 0.0
    %165 = vmatpush.msra.mxu0 0.0
    %166 = vmatpush.msra.mxu0 %v87
    %167 = vmatpush.msra.mxu0 %v83
    %168 = vmatmul.f32.gmra.mxu0 %v101
    %v169 = vpop.f32.mrf.mxu0
    %v170 = vadd.f32 %v93, %v169
    %171 = vmatmul.f32.gmra.mxu0 %v104
    %v172 = vpop.f32.mrf.mxu0
    %v173 = vadd.f32 %v93, %v172
    %174 = vdwg.mxu0
    %175 = vmatpush.msra.mxu0 0.0
    %176 = vmatpush.msra.mxu0 0.0
    %177 = vmatpush.msra.mxu0 0.0
    %178 = vmatpush.msra.mxu0 0.0
    %179 = vmatpush.msra.mxu0 0.0
    %180 = vmatpush.msra.mxu0 0.0
    %181 = vmatpush.msra.mxu0 0.0
    %182 = vmatpush.msra.mxu0 0.0
    %183 = vmatpush.msra.mxu0 0.0
    %184 = vmatpush.msra.mxu0 0.0
    %185 = vmatpush.msra.mxu0 0.0
    %186 = vmatpush.msra.mxu0 0.0
    %187 = vmatpush.msra.mxu0 0.0
    %188 = vmatpush.msra.mxu0 0.0
    %189 = vmatpush.msra.mxu0 %v88
    %190 = vmatpush.msra.mxu0 %v84
    %191 = vmatmul.f32.gmra.mxu0 %v101
    %v192 = vpop.f32.mrf.mxu0
    %v193 = vadd.f32 %v94, %v192
    %194 = vmatmul.f32.gmra.mxu0 %v104
    %v195 = vpop.f32.mrf.mxu0
    %v196 = vadd.f32 %v94, %v195
    %197 = vdwg.mxu0
    %v198 = vmax.f32 %v124, 0.0
    %v199 = vmax.f32 %v147, 0.0
    %v200 = vmax.f32 %v170, 0.0
    %v201 = vmax.f32 %v127, 0.0
    %v202 = vmax.f32 %v150, 0.0
    %v203 = vmax.f32 %v173, 0.0
    %v204 = vld [vmem:[#allocation8] sm:$0xff]
    %v205 = vld [vmem:[#allocation8 + $0x8] sm:$0xff]
    %v206 = vld [vmem:[#allocation8 + $0x10] sm:$0xff]
    %v207 = vld [vmem:[#allocation8 + $0x18] sm:$0xff]
    %v208 = vld [vmem:[#allocation8 + $0x20] sm:$0xff]
    %v209 = vld [vmem:[#allocation8 + $0x28] sm:$0xff]
    %v210 = vld [vmem:[#allocation8 + $0x30] sm:$0xff]
    %v211 = vld [vmem:[#allocation8 + $0x38] sm:$0xff]
    %v212 = vld [vmem:[#allocation8 + $0x40] sm:$0xff]
    %v213 = vld [vmem:[#allocation8 + $0x48] sm:$0xff]
    %v214 = vld [vmem:[#allocation8 + $0x50] sm:$0xff]
    %v215 = vld [vmem:[#allocation8 + $0x58] sm:$0xff]
    %v216 = vld [vmem:[#allocation8 + $0x60] sm:$0xff]
    %v217 = vld [vmem:[#allocation8 + $0x68] sm:$0xff]
    %v218 = vld [vmem:[#allocation8 + $0x70] sm:$0xff]
    %v219 = vld [vmem:[#allocation8 + $0x78] sm:$0xff]
    %v220 = vld [vmem:[#allocation8 + $0x80] sm:$0xff]
    %v221 = vld [vmem:[#allocation8 + $0x88] sm:$0xff]
    %v222 = vld [vmem:[#allocation8 + $0x90] sm:$0xff]
    %v223 = vld [vmem:[#allocation8 + $0x98] sm:$0xff]
    %v224 = vld [vmem:[#allocation8 + $0xa0] sm:$0xff]
    %v225 = vld [vmem:[#allocation8 + $0xa8] sm:$0xff]
    %v226 = vld [vmem:[#allocation8 + $0xb0] sm:$0xff]
    %v227 = vld [vmem:[#allocation8 + $0xb8] sm:$0xff]
    %v228 = vld [vmem:[#allocation8 + $0xc0] sm:$0xff]
    %v229 = vld [vmem:[#allocation8 + $0xc8] sm:$0xff]
    %v230 = vld [vmem:[#allocation8 + $0xd0] sm:$0xff]
    %v231 = vld [vmem:[#allocation8 + $0xd8] sm:$0xff]
    %v232 = vld [vmem:[#allocation8 + $0xe0] sm:$0xff]
    %v233 = vld [vmem:[#allocation8 + $0xe8] sm:$0xff]
    %v234 = vld [vmem:[#allocation8 + $0xf0] sm:$0xff]
    %v235 = vld [vmem:[#allocation8 + $0xf8] sm:$0xff]
    %v236 = vld [vmem:[#allocation8 + $0x100] sm:$0xff]
    %v237 = vld [vmem:[#allocation8 + $0x108] sm:$0xff]
    %v238 = vld [vmem:[#allocation8 + $0x110] sm:$0xff]
    %v239 = vld [vmem:[#allocation8 + $0x118] sm:$0xff]
    %v240 = vld [vmem:[#allocation8 + $0x120] sm:$0xff]
    %v241 = vld [vmem:[#allocation8 + $0x128] sm:$0xff]
    %v242 = vld [vmem:[#allocation8 + $0x130] sm:$0xff]
    %v243 = vld [vmem:[#allocation8 + $0x138] sm:$0xff]
    %v244 = vld [vmem:[#allocation8 + $0x140] sm:$0xff]
    %v245 = vld [vmem:[#allocation8 + $0x148] sm:$0xff]
    %v246 = vld [vmem:[#allocation8 + $0x150] sm:$0xff]
    %v247 = vld [vmem:[#allocation8 + $0x158] sm:$0xff]
    %v248 = vld [vmem:[#allocation8 + $0x160] sm:$0xff]
    %v249 = vld [vmem:[#allocation8 + $0x168] sm:$0xff]
    %v250 = vld [vmem:[#allocation8 + $0x170] sm:$0xff]
    %v251 = vld [vmem:[#allocation8 + $0x178] sm:$0xff]
    %252 = vmatpush.msra.mxu0 %v219
    %253 = vmatpush.msra.mxu0 %v218
    %254 = vmatpush.msra.mxu0 %v217
    %255 = vmatpush.msra.mxu0 %v216
    %256 = vmatpush.msra.mxu0 %v215
    %257 = vmatpush.msra.mxu0 %v214
    %258 = vmatpush.msra.mxu0 %v213
    %259 = vmatpush.msra.mxu0 %v212
    %260 = vmatpush.msra.mxu0 %v211
    %261 = vmatpush.msra.mxu0 %v210
    %262 = vmatpush.msra.mxu0 %v209
    %263 = vmatpush.msra.mxu0 %v208
    %264 = vmatpush.msra.mxu0 %v207
    %265 = vmatpush.msra.mxu0 %v206
    %266 = vmatpush.msra.mxu0 %v205
    %267 = vmatpush.msra.mxu0 %v204
    %268 = vmatmul.f32.gmra.mxu0 %v198
    %v269 = vpop.f32.mrf.mxu0
    %v270 = vadd.f32 0.0, %v269
    %271 = vmatmul.f32.gmra.mxu0 %v201
    %v272 = vpop.f32.mrf.mxu0
    %v273 = vadd.f32 0.0, %v272
    %274 = vdwg.mxu0
    %275 = vmatpush.msra.mxu0 %v235
    %276 = vmatpush.msra.mxu0 %v234
    %277 = vmatpush.msra.mxu0 %v233
    %278 = vmatpush.msra.mxu0 %v232
    %279 = vmatpush.msra.mxu0 %v231
    %280 = vmatpush.msra.mxu0 %v230
    %281 = vmatpush.msra.mxu0 %v229
    %282 = vmatpush.msra.mxu0 %v228
    %283 = vmatpush.msra.mxu0 %v227
    %284 = vmatpush.msra.mxu0 %v226
    %285 = vmatpush.msra.mxu0 %v225
    %286 = vmatpush.msra.mxu0 %v224
    %287 = vmatpush.msra.mxu0 %v223
    %288 = vmatpush.msra.mxu0 %v222
    %289 = vmatpush.msra.mxu0 %v221
    %290 = vmatpush.msra.mxu0 %v220
    %291 = vmatmul.f32.gmra.mxu0 %v199
    %v292 = vpop.f32.mrf.mxu0
    %v293 = vadd.f32 %v270, %v292
    %294 = vmatmul.f32.gmra.mxu0 %v202
    %v295 = vpop.f32.mrf.mxu0
    %v296 = vadd.f32 %v273, %v295
    %297 = vdwg.mxu0
    %298 = vmatpush.msra.mxu0 %v251
    %299 = vmatpush.msra.mxu0 %v250
    %300 = vmatpush.msra.mxu0 %v249
    %301 = vmatpush.msra.mxu0 %v248
    %302 = vmatpush.msra.mxu0 %v247
    %303 = vmatpush.msra.mxu0 %v246
    %304 = vmatpush.msra.mxu0 %v245
    %305 = vmatpush.msra.mxu0 %v244
    %306 = vmatpush.msra.mxu0 %v243
    %307 = vmatpush.msra.mxu0 %v242
    %308 = vmatpush.msra.mxu0 %v241
    %309 = vmatpush.msra.mxu0 %v240
    %310 = vmatpush.msra.mxu0 %v239
    %311 = vmatpush.msra.mxu0 %v238
    %312 = vmatpush.msra.mxu0 %v237
    %313 = vmatpush.msra.mxu0 %v236
    %314 = vmatmul.f32.gmra.mxu0 %v200
    %v315 = vpop.f32.mrf.mxu0
    %v316 = vadd.f32 %v293, %v315
    %317 = vmatmul.f32.gmra.mxu0 %v203
    %v318 = vpop.f32.mrf.mxu0
    %v319 = vadd.f32 %v296, %v318
    %320 = vdwg.mxu0
    %v321 = vadd.f32 %v193, %v316
    %v322 = vadd.f32 %v196, %v319
    %v323 = vmax.f32 %v321, 0.0
    %v324 = vmax.f32 %v322, 0.0
    %v325 = vand.u32 2147483647, %v321
    %v326 = vand.u32 2147483647, %v322
    %v327 = vsub.f32 0.0, %v325
    %v328 = vsub.f32 0.0, %v326
    %v329 = vmul.f32 %v327, 1.442695
    %v330 = vpow.pop %v329
    %v331 = vmul.f32 %v328, 1.442695
    %v332 = vpow.pop %v331
    %v333 = vadd.f32 %v330, 1.0
    %v334 = vlog2.pop %v333
    %v335 = vmul.f32 %v334, 0.6931472
    %v336 = vmul.f32 -0.5, %v330
    %v337 = vadd.f32 %v336, 1.0
    %v338 = vmul.f32 %v337, %v330
    %v339 = vand.u32 2147483647, %v330
    %vm340 = vcmp.lt.f32.partialorder %v339, 0.0004427343
    %v341 = vsel %vm340, %v338, %v335
    %v342 = vadd.f32 %v332, 1.0
    %v343 = vlog2.pop %v342
    %v344 = vmul.f32 %v343, 0.6931472
    %v345 = vmul.f32 -0.5, %v332
    %v346 = vadd.f32 %v345, 1.0
    %v347 = vmul.f32 %v346, %v332
    %v348 = vand.u32 2147483647, %v332
    %vm349 = vcmp.lt.f32.partialorder %v348, 0.0004427343
    %v350 = vsel %vm349, %v347, %v344
    %v351 = vadd.f32 %v323, %v341
    %v352 = vadd.f32 %v324, %v350
    %353 = vst [vmem:[#allocation10] sm:$0xff] %v351
    %354 = vst [vmem:[#allocation10 + $0x8] sm:$0xff] %v352
    // Predicated region
    $region34: #{tpu_custom_call.1} parent=1 // pred_check
      _
    $region35: #{tpu_custom_call.1} parent=1 // pred_check_branch
      %356 = sbr.rel (0) target = $region37
    $region36: #{tpu_custom_call.1} parent=1 // pred_region
      %358 = vsyncadd [#allocation4], 0
      %s359 = sshll.u32 [#allocation10], 4
      %s360 = int_to_ptr.vmem [resolvable:$true] %s359
      %s361 = sshll.u32 %s4, 4
      %s362 = int_to_ptr.hbm [resolvable:$true] %s361
      %367 = dma.vmem_to_hbm [thread:$0]  %s360, 256, %s362, [#allocation4], 128, 128, 8
    $region37: #{tpu_custom_call.1} parent=1 // pred_fallthru
      _
    // Predicated region
    $region38: #{tpu_custom_call.1} parent=1 // pred_check
      _
    $region39: #{tpu_custom_call.1} parent=1 // pred_check_branch
      %369 = sbr.rel (0) target = $region41
    $region40: #{tpu_custom_call.1} parent=1 // pred_region
      %371 = dma.done [#allocation4], 256
    $region41: #{tpu_custom_call.1} parent=1 // pred_fallthru
      _
    %372 = vsyncpa [#allocation3], 1
    %373 = vsyncpa [#allocation6], 1
    %374 = vsyncpa [#allocation9], 1
    %375 = vsyncpa [#allocation4], 1

</llo_original>
